<compile_context>
chip_gen: v6e
topology: v6e:2x2x1
jax: 0.10.0
libtpu: 0.0.40
codegen_flags: <defaults>
</compile_context>

<pallas_src>
import functools

import numpy as np
import jax
import jax.numpy as jnp
from jax import lax
from jax.experimental import pallas as pl
from jax.experimental.pallas import tpu as pltpu


_VMEM_LIMIT_BYTES = 32 * 1024 * 1024   # explicit scoped-VMEM budget, safe on v5e/v6e/v7x
_MAX_LANE_TILE = 512                   # lane (M) tile: multiple of 128, sized for v7x VMEM


def _round_up(x, m):
    return ((x + m - 1) // m) * m


def _pick_lane_tile(m):
    """Return (tile, padded_m): tile is a multiple of 128 and divides padded_m."""
    if m <= _MAX_LANE_TILE:
        p = _round_up(m, 128)
        return p, p
    return _MAX_LANE_TILE, _round_up(m, _MAX_LANE_TILE)


# ----------------------------------------------------------------------------- #
# Pallas kernels
# ----------------------------------------------------------------------------- #
def _matmul_t_kernel(w_ref, x_ref, b_ref, o_ref, *, apply_relu):
    # o = act(w @ x + b); w:(N,K) bf16, x:(K,TM) bf16, b:(N,1) f32, o:(N,TM)
    acc = jnp.dot(w_ref[...], x_ref[...], preferred_element_type=jnp.float32)
    acc = acc + b_ref[...]
    if apply_relu:
        acc = jnp.maximum(acc, 0.0)
    o_ref[...] = acc.astype(o_ref.dtype)


def _matmul_t_maxpool_kernel(w_ref, x_ref, b_ref, o_ref):
    # Fused Conv3d(+bias) -> ReLU -> MaxPool3d(2) on a lane tile.
    # x_ref: (8, K, TM) -- one im2col patch matrix per 2x2x2 pooling offset.
    # max(relu(z_o)) == relu(max(z_o)) since ReLU is monotone.
    acc = jnp.dot(w_ref[...], x_ref[0], preferred_element_type=jnp.float32)
    for o in range(1, 8):
        acc = jnp.maximum(
            acc, jnp.dot(w_ref[...], x_ref[o], preferred_element_type=jnp.float32))
    acc = jnp.maximum(acc + b_ref[...], 0.0)
    o_ref[...] = acc.astype(o_ref.dtype)


def _projection_kernel(x_ref, w0_ref, b0_ref, w1_ref, b1_ref, o_ref):
    # Fused Linear -> ReLU -> Linear -> ReLU.  x:(F,Bp) bf16, out:(O,Bp) f32.
    h = jnp.dot(w0_ref[...], x_ref[...], preferred_element_type=jnp.float32)
    h = jnp.maximum(h + b0_ref[...], 0.0)
    out = jnp.dot(w1_ref[...], h.astype(jnp.bfloat16),
                  preferred_element_type=jnp.float32)
    out = jnp.maximum(out + b1_ref[...], 0.0)
    o_ref[...] = out.astype(o_ref.dtype)


# ----------------------------------------------------------------------------- #
# Pallas wrappers
# ----------------------------------------------------------------------------- #
def matmul_t(wt, xt, b, *, apply_relu=True, out_dtype=jnp.bfloat16):
    """Lane-dense transposed matmul: out = act(wt @ xt + b).

    wt: (N, K), xt: (K, M), b: (N, 1) f32 -> (N, M) in out_dtype.
    M (long axis) is padded to a multiple of 128 and tiled on the lane axis.
    """
    N, K = wt.shape
    _, M = xt.shape
    tm, m_pad = _pick_lane_tile(M)
    if m_pad != M:
        xt = jnp.pad(xt, ((0, 0), (0, m_pad - M)))
    flops = 2 * N * K * m_pad
    bytes_accessed = (wt.size * wt.dtype.itemsize + K * m_pad * xt.dtype.itemsize
                      + b.size * 4 + N * m_pad * jnp.dtype(out_dtype).itemsize)
    out = pl.pallas_call(
        functools.partial(_matmul_t_kernel, apply_relu=apply_relu),
        out_shape=jax.ShapeDtypeStruct((N, m_pad), out_dtype),
        grid=(m_pad // tm,),
        in_specs=[
            pl.BlockSpec((N, K), lambda m: (0, 0)),
            pl.BlockSpec((K, tm), lambda m: (0, m)),
            pl.BlockSpec((N, 1), lambda m: (0, 0)),
        ],
        out_specs=pl.BlockSpec((N, tm), lambda m: (0, m)),
        compiler_params=pltpu.CompilerParams(
            dimension_semantics=("parallel",),
            vmem_limit_bytes=_VMEM_LIMIT_BYTES),
        cost_estimate=pl.CostEstimate(flops=flops, transcendentals=0,
                                      bytes_accessed=bytes_accessed),
    )(wt, xt, b)
    if m_pad != M:
        out = out[:, :M]
    return out


def matmul_t_maxpool(wt, xt8, b, *, out_dtype=jnp.bfloat16):
    """Fused conv-matmul + ReLU + 2x2x2 max pool.

    wt: (N, K), xt8: (8, K, Mp) patch matrices per pooling offset, b: (N, 1).
    Returns (N, Mp) pooled, ReLU'd output.
    """
    N, K = wt.shape
    _, _, M = xt8.shape
    tm, m_pad = _pick_lane_tile(M)
    if m_pad != M:
        xt8 = jnp.pad(xt8, ((0, 0), (0, 0), (0, m_pad - M)))
    flops = 2 * N * K * m_pad * 8
    bytes_accessed = (wt.size * wt.dtype.itemsize + 8 * K * m_pad * xt8.dtype.itemsize
                      + b.size * 4 + N * m_pad * jnp.dtype(out_dtype).itemsize)
    out = pl.pallas_call(
        _matmul_t_maxpool_kernel,
        out_shape=jax.ShapeDtypeStruct((N, m_pad), out_dtype),
        grid=(m_pad // tm,),
        in_specs=[
            pl.BlockSpec((N, K), lambda m: (0, 0)),
            pl.BlockSpec((8, K, tm), lambda m: (0, 0, m)),
            pl.BlockSpec((N, 1), lambda m: (0, 0)),
        ],
        out_specs=pl.BlockSpec((N, tm), lambda m: (0, m)),
        compiler_params=pltpu.CompilerParams(
            dimension_semantics=("parallel",),
            vmem_limit_bytes=_VMEM_LIMIT_BYTES),
        cost_estimate=pl.CostEstimate(flops=flops, transcendentals=0,
                                      bytes_accessed=bytes_accessed),
    )(wt, xt8, b)
    if m_pad != M:
        out = out[:, :M]
    return out


def projection(xt, w0, b0, w1, b1):
    """Fused Linear->ReLU->Linear->ReLU.

    xt: (F, B) features-x-batch; w0: (H, F), w1: (O, H) (PyTorch orientation).
    Returns (B, O) float32.
    """
    F, B = xt.shape
    H = w0.shape[0]
    O = w1.shape[0]
    bp = _round_up(B, 128)
    if bp != B:
        xt = jnp.pad(xt, ((0, 0), (0, bp - B)))
    out = pl.pallas_call(
        _projection_kernel,
        out_shape=jax.ShapeDtypeStruct((O, bp), jnp.float32),
        in_specs=[pl.BlockSpec(memory_space=pltpu.MemorySpace.VMEM)] * 5,
        out_specs=pl.BlockSpec(memory_space=pltpu.MemorySpace.VMEM),
        compiler_params=pltpu.CompilerParams(vmem_limit_bytes=_VMEM_LIMIT_BYTES),
    )(xt.astype(jnp.bfloat16), w0.astype(jnp.bfloat16), b0.reshape(H, 1),
      w1.astype(jnp.bfloat16), b1.reshape(O, 1))
    return out[:, :B].T


# ----------------------------------------------------------------------------- #
# im2col (XLA-side, channels-leading layout) + conv layer wrappers
# ----------------------------------------------------------------------------- #
def _im2col_t(x):
    """x: (Cin, B, D, H, W) -> patches^T (Cin*27, B*Do*Ho*Wo), valid 3x3x3 conv."""
    Cin, B, D, H, W = x.shape
    Do, Ho, Wo = D - 2, H - 2, W - 2
    slabs = [x[:, :, kz:kz + Do, ky:ky + Ho, kx:kx + Wo]
             for kz in range(3) for ky in range(3) for kx in range(3)]
    p = jnp.stack(slabs, axis=1)                       # (Cin, 27, B, Do, Ho, Wo)
    return p.reshape(Cin * 27, B * Do * Ho * Wo), (B, Do, Ho, Wo)


def _im2col_pool_t(x):
    """x: (Cin, B, D, H, W) -> (8, Cin*27, B*Dp*Hp*Wp): one patch matrix per
    2x2x2 pooling offset for conv3x3x3(valid) followed by MaxPool3d(2)."""
    Cin, B, D, H, W = x.shape
    Do, Ho, Wo = D - 2, H - 2, W - 2
    Dp, Hp, Wp = Do // 2, Ho // 2, Wo // 2
    per_offset = []
    for dz in range(2):
        for dy in range(2):
            for dx in range(2):
                slabs = []
                for kz in range(3):
                    for ky in range(3):
                        for kx in range(3):
                            s0, s1, s2 = dz + kz, dy + ky, dx + kx
                            slabs.append(
                                x[:, :,
                                  s0:s0 + 2 * Dp - 1:2,
                                  s1:s1 + 2 * Hp - 1:2,
                                  s2:s2 + 2 * Wp - 1:2])
                p = jnp.stack(slabs, axis=1)           # (Cin, 27, B, Dp, Hp, Wp)
                per_offset.append(p.reshape(Cin * 27, B * Dp * Hp * Wp))
    return jnp.stack(per_offset, axis=0), (B, Dp, Hp, Wp)


def conv3d_relu(x, w, b):
    """x: (Cin, B, D, H, W) bf16; w: (Cout, Cin, 3,3,3) f32; b: (Cout,) f32."""
    Cout, Cin = w.shape[:2]
    patches, (B, Do, Ho, Wo) = _im2col_t(x)
    wt = w.reshape(Cout, Cin * 27).astype(jnp.bfloat16)
    out = matmul_t(wt, patches.astype(jnp.bfloat16), b.reshape(Cout, 1),
                   apply_relu=True, out_dtype=jnp.bfloat16)
    return out.reshape(Cout, B, Do, Ho, Wo)


def conv3d_relu_maxpool(x, w, b):
    """Conv3d(3, valid) + ReLU + MaxPool3d(2), fused in one Pallas call."""
    Cout, Cin = w.shape[:2]
    patches8, (B, Dp, Hp, Wp) = _im2col_pool_t(x)
    wt = w.reshape(Cout, Cin * 27).astype(jnp.bfloat16)
    out = matmul_t_maxpool(wt, patches8.astype(jnp.bfloat16), b.reshape(Cout, 1),
                           out_dtype=jnp.bfloat16)
    return out.reshape(Cout, B, Dp, Hp, Wp)


# ----------------------------------------------------------------------------- #
# Module: parameters + forward
# ----------------------------------------------------------------------------- #
def init_params(key, input_size, output_dim):
    D, H, W = input_size

    def spatial(s):                       # two valid 3-convs then pool, twice
        return ((s - 4) // 2 - 4) // 2

    cnn_output_dim = 16 * spatial(D) * spatial(H) * spatial(W)

    conv_shapes = [(4, 1), (8, 4), (16, 8), (16, 16)]
    lin_shapes = [(output_dim * 2, cnn_output_dim), (output_dim, output_dim * 2)]

    params = {"cnn_output_dim": cnn_output_dim}
    keys = jax.random.split(key, 2 * (len(conv_shapes) + len(lin_shapes)))
    k = 0
    for i, (cout, cin) in enumerate(conv_shapes):
        fan_in = cin * 27
        params[f"conv{i}_w"] = (jax.random.normal(keys[k], (cout, cin, 3, 3, 3),
                                                  jnp.float32) / np.sqrt(fan_in))
        params[f"conv{i}_b"] = 0.1 * jax.random.normal(keys[k + 1], (cout,), jnp.float32)
        k += 2
    for j, (fout, fin) in enumerate(lin_shapes):
        params[f"lin{j}_w"] = (jax.random.normal(keys[k], (fout, fin), jnp.float32)
                               / np.sqrt(fin))
        params[f"lin{j}_b"] = 0.1 * jax.random.normal(keys[k + 1], (fout,), jnp.float32)
        k += 2
    return params


def forward(params, x):
    """x: (B, D, H, W) or (B, 1, D, H, W) float32 -> (B, output_dim) float32."""
    if x.ndim == 4:
        x = x[:, None]                                  # (B, 1, D, H, W)
    # Channels-leading layout keeps B*D*H*W contiguous on the lane axis of every
    # Pallas matmul without inter-layer transposes.
    x = jnp.transpose(x, (1, 0, 2, 3, 4)).astype(jnp.bfloat16)   # (1, B, D, H, W)
    x = conv3d_relu(x, params["conv0_w"], params["conv0_b"])
    x = conv3d_relu_maxpool(x, params["conv1_w"], params["conv1_b"])
    x = conv3d_relu(x, params["conv2_w"], params["conv2_b"])
    x = conv3d_relu_maxpool(x, params["conv3_w"], params["conv3_b"])
    # PyTorch flattens NCDHW per batch element in (C, D, H, W) order.
    C, B, Dp, Hp, Wp = x.shape
    xt = jnp.transpose(x, (0, 2, 3, 4, 1)).reshape(C * Dp * Hp * Wp, B)
    assert xt.shape[0] == params["cnn_output_dim"]
    return projection(xt, params["lin0_w"], params["lin0_b"],
                      params["lin1_w"], params["lin1_b"])


# ----------------------------------------------------------------------------- #
# Pure-JAX (XLA, float32) reference for verification
# ----------------------------------------------------------------------------- #
def ref_forward(params, x):
    if x.ndim == 4:
        x = x[:, None]

    def conv(a, w, b):
        y = lax.conv_general_dilated(a, w, window_strides=(1, 1, 1), padding="VALID",
                                     dimension_numbers=("NCDHW", "OIDHW", "NCDHW"))
        return jnp.maximum(y + b.reshape(1, -1, 1, 1, 1), 0.0)

    def pool(a):
        return lax.reduce_window(a, -jnp.inf, lax.max,
                                 (1, 1, 2, 2, 2), (1, 1, 2, 2, 2), "VALID")

    x = conv(x, params["conv0_w"], params["conv0_b"])
    x = pool(conv(x, params["conv1_w"], params["conv1_b"]))
    x = conv(x, params["conv2_w"], params["conv2_b"])
    x = pool(conv(x, params["conv3_w"], params["conv3_b"]))
    x = x.reshape(-1, params["cnn_output_dim"])
    x = jnp.maximum(x @ params["lin0_w"].T + params["lin0_b"], 0.0)
    x = jnp.maximum(x @ params["lin1_w"].T + params["lin1_b"], 0.0)
    return x


if __name__ == "__main__":
    input_size = (16, 16, 16)     # smallest size that survives the conv/pool stack
    output_dim = 32
    batch = 2

    key = jax.random.PRNGKey(0)
    pkey, xkey = jax.random.split(key)
    params = init_params(pkey, input_size, output_dim)

    x = jax.random.normal(xkey, (batch, *input_size), jnp.float32)  # dim==4 path

    out = jax.block_until_ready(forward(params, x))
    ref = jax.block_until_ready(ref_forward(params, x))

    assert out.shape == (batch, output_dim), out.shape
    # bf16 matmul operands / f32 accumulation vs. pure-f32 reference.
    np.testing.assert_allclose(np.asarray(out), np.asarray(ref), rtol=5e-2, atol=5e-2)

    print("KERNEL_OK")
</pallas_src>

<mosaic_0001>
module attributes {stable_mosaic.version = 11 : i64} {
  func.func @_matmul_t_kernel(%arg0: i32, %arg1: memref<4x27xbf16, #tpu.memory_space<vmem>>, %arg2: memref<27x512xbf16, #tpu.memory_space<vmem>>, %arg3: memref<4x1xf32, #tpu.memory_space<vmem>>, %arg4: memref<4x512xbf16, #tpu.memory_space<vmem>>) attributes {dimension_semantics = [#tpu.dimension_semantics<parallel>], iteration_bounds = array<i64: 11>, scalar_prefetch = 0 : i64, scratch_operands = 0 : i64, tpu.core_type = #tpu.core_type<tc>, window_params = [{pipeline_mode = #tpu.pipeline_mode<synchronous>, transform_indices = @transform_0, window_bounds = array<i64: 4, 27>}, {transform_indices = @transform_1, window_bounds = array<i64: 27, 512>}, {pipeline_mode = #tpu.pipeline_mode<synchronous>, transform_indices = @transform_2, window_bounds = array<i64: 4, 1>}, {transform_indices = @transform_3, window_bounds = array<i64: 4, 512>}]} {
    %c0 = arith.constant 0 : index
    %c0_0 = arith.constant 0 : index
    %0 = vector.load %arg1[%c0, %c0_0] : memref<4x27xbf16, #tpu.memory_space<vmem>>, vector<4x27xbf16>
    %c0_1 = arith.constant 0 : index
    %c0_2 = arith.constant 0 : index
    %1 = vector.load %arg2[%c0_1, %c0_2] : memref<27x512xbf16, #tpu.memory_space<vmem>>, vector<27x512xbf16>
    %cst = arith.constant dense<0.000000e+00> : vector<4x512xf32>
    %2 = tpu.matmul %0, %1, %cst {dimension_numbers = #tpu.dot_dimension_numbers<[1], [0], [0], [1], [0, 0, 1, 1], [], []>} : vector<4x27xbf16>, vector<27x512xbf16>, vector<4x512xf32> -> vector<4x512xf32>
    %c0_3 = arith.constant 0 : index
    %c0_4 = arith.constant 0 : index
    %3 = vector.load %arg3[%c0_3, %c0_4] : memref<4x1xf32, #tpu.memory_space<vmem>>, vector<4x1xf32>
    %4 = vector.broadcast %3 : vector<4x1xf32> to vector<4x512xf32>
    %5 = arith.addf %2, %4 : vector<4x512xf32>
    %cst_5 = arith.constant 0.000000e+00 : f32
    %6 = vector.broadcast %cst_5 : f32 to vector<4x512xf32>
    %7 = arith.maximumf %5, %6 : vector<4x512xf32>
    %8 = arith.truncf %7 : vector<4x512xf32> to vector<4x512xbf16>
    %c0_6 = arith.constant 0 : index
    %c0_7 = arith.constant 0 : index
    %9 = vector.load %arg4[%c0_6, %c0_7] : memref<4x512xbf16, #tpu.memory_space<vmem>>, vector<4x512xbf16>
    tpu.vector_store %arg4[%c0_6, %c0_7], %8 {strides = array<i32>} : memref<4x512xbf16, #tpu.memory_space<vmem>>, vector<4x512xbf16>,
    return
  }
  func.func @transform_0(%arg0: i32) -> (i32, i32) {
    %c0_i32 = arith.constant 0 : i32
    %c0_i32_0 = arith.constant 0 : i32
    %c0_i32_1 = arith.constant 0 : i32
    return %c0_i32, %c0_i32_0 : i32, i32
  }
  func.func @transform_1(%arg0: i32) -> (i32, i32) {
    %c0_i32 = arith.constant 0 : i32
    %c0_i32_0 = arith.constant 0 : i32
    return %c0_i32, %arg0 : i32, i32
  }
  func.func @transform_2(%arg0: i32) -> (i32, i32) {
    %c0_i32 = arith.constant 0 : i32
    %c0_i32_0 = arith.constant 0 : i32
    %c0_i32_1 = arith.constant 0 : i32
    return %c0_i32, %c0_i32_0 : i32, i32
  }
  func.func @transform_3(%arg0: i32) -> (i32, i32) {
    %c0_i32 = arith.constant 0 : i32
    %c0_i32_0 = arith.constant 0 : i32
    return %c0_i32, %arg0 : i32, i32
  }
}

</mosaic_0001>

<llo_original>
// kernel: tpu_custom_call.1
$region0: #{tpu_custom_call.1}
  #allocation0 [shape = 'u32[]', space=smem, size = 0x4, offset = 0x4, fixed_abs, tag = 'smem constant byte address 0x4 - core index']
  #allocation1 [shape = 'u32[144,128]{1,0:T(1,128)}', space=vmem, size = 0x12000, scoped, tag = 'internal scratch']
  %s0 = inlined_call_operand.vmem [shape: bf16[4,27], index: 0, kind: input, shape index: {}]
  %s1 = inlined_call_operand.hbm [shape: bf16[27,5632], index: 1, kind: input, shape index: {}]
  %s2 = inlined_call_operand.vmem [shape: f32[4,1], index: 2, kind: input, shape index: {}]
  %s3 = inlined_call_operand.hbm [shape: bf16[4,5632], index: 3, kind: output, shape index: {}]
  %s4 = sld [smem:[#allocation0]]
  $region49: #{tpu_custom_call.1} parent=0
    _
  %s6 = ssub.s32 1, %s4
  %s7 = scalar_select 0, %s6, %s4
  $region1: #{tpu_custom_call.1} parent=0
    #allocation2 [shape = 'u8[65536]{0}', space=vmem, size = 0x10000, scoped, tag = 'input window, operand 1']
    #allocation3 [shape = 's32[2]{0}', space=sflag, size = 0x8, scoped, tag = 'scoped memory for tpu_custom_call.1']
    #allocation4 [shape = 's32[2]{0}', space=sflag, size = 0x8, scoped, tag = 'scoped memory for tpu_custom_call.1']
    #allocation5 [shape = 'u8[8192]{0}', space=vmem, size = 0x2000, scoped, tag = 'output window, operand 0']
    %8 = vsyncpa [#allocation3], 0
    %s9 = scalar_lea.sflag [#allocation3], 1
    %10 = vsyncpa %s9, 0
    %11 = vsyncpa [#allocation4], 0
    %s12 = scalar_lea.sflag [#allocation4], 1
    %13 = vsyncpa %s12, 0
    loop: start=0, step=1, limit=13
    $region2: #{tpu_custom_call.1} parent=1 // loop_pre_header
      _
    $region3: #{tpu_custom_call.1} parent=1 // loop_header
      %s15 = sphi 0, %s19
      %p16 = scmp.ge.s32.totalorder %s15, 13
      %s23 = sphi 0, %s23
      %s25 = sphi 0, %s23
      %s26 = sphi 0, %s25
      %s40 = sphi 0, %s26
      %s46 = sphi 0, %s48
      %s49 = sphi 0, %s46
      %s50 = sphi 0, %s49
      %s66 = sphi 0, %s50
      %s70 = sphi 0, %s70
      %s72 = sphi 0, %s70
      %s73 = sphi 0, %s72
      %s87 = sphi 0, %s73
      %s93 = sphi 0, %s95
      %s96 = sphi 0, %s93
      %s97 = sphi 0, %s96
      %s113 = sphi 0, %s97
    $region4: #{tpu_custom_call.1} parent=1 // loop_header_branch
      %18 = sbr.rel (%p16) target = $region8
    $region5: #{tpu_custom_call.1} parent=1 // loop_body
      %s20 = ssub.s32 %s15, 1
      %s21 = ssub.s32 %s15, 2
      %s22 = sadd.s32 %s15, 1
      %s24 = sadd.s32 %s23, 1
      %p27 = scmp.eq.s32.totalorder %s15, 10
      %p28 = scmp.ne.s32.totalorder %s23, %s25
      %p29 = scmp.eq.s32.totalorder %s15, 0
      %p30 = por %p28, %p29
      %p31 = scmp.ne.s32.totalorder %s23, %s25
      %p32 = scmp.eq.s32.totalorder %s20, 10
      %p33 = por %p31, %p32
      %p34 = scmp.ne.s32.totalorder %s25, %s26
      %p35 = scmp.eq.s32.totalorder %s20, 0
      %p36 = por %p34, %p35
      %p37 = scmp.ne.s32.totalorder %s25, %s26
      %p38 = scmp.eq.s32.totalorder %s21, 10
      %p39 = por %p37, %p38
      %p41 = scmp.ne.s32.totalorder %s26, %s40
      %p42 = scmp.eq.s32.totalorder %s21, 0
      %p43 = por %p41, %p42
      %s44 = ssub.s32 %s15, %s22
      %p45 = scmp.eq.s32.totalorder %s44, 0
      %s47 = sadd.s32 %s46, 1
      %s48 = scalar_select %p45, %s46, %s47
      %p51 = pneg %p45
      %p52 = scmp.eq.s32.totalorder %s15, 10
      %p53 = por %p51, %p52
      %p54 = scmp.ne.s32.totalorder %s46, %s49
      %p55 = scmp.eq.s32.totalorder %s15, 0
      %p56 = por %p54, %p55
      %p57 = scmp.ne.s32.totalorder %s46, %s49
      %p58 = scmp.eq.s32.totalorder %s20, 10
      %p59 = por %p57, %p58
      %p60 = scmp.ne.s32.totalorder %s49, %s50
      %p61 = scmp.eq.s32.totalorder %s20, 0
      %p62 = por %p60, %p61
      %p63 = scmp.ne.s32.totalorder %s49, %s50
      %p64 = scmp.eq.s32.totalorder %s21, 10
      %p65 = por %p63, %p64
      %p67 = scmp.ne.s32.totalorder %s50, %s66
      %p68 = scmp.eq.s32.totalorder %s21, 0
      %p69 = por %p67, %p68
      %s71 = sadd.s32 %s70, 1
      %p74 = scmp.eq.s32.totalorder %s15, 10
      %p75 = scmp.ne.s32.totalorder %s70, %s72
      %p76 = scmp.eq.s32.totalorder %s15, 0
      %p77 = por %p75, %p76
      %p78 = scmp.ne.s32.totalorder %s70, %s72
      %p79 = scmp.eq.s32.totalorder %s20, 10
      %p80 = por %p78, %p79
      %p81 = scmp.ne.s32.totalorder %s72, %s73
      %p82 = scmp.eq.s32.totalorder %s20, 0
      %p83 = por %p81, %p82
      %p84 = scmp.ne.s32.totalorder %s72, %s73
      %p85 = scmp.eq.s32.totalorder %s21, 10
      %p86 = por %p84, %p85
      %p88 = scmp.ne.s32.totalorder %s73, %s87
      %p89 = scmp.eq.s32.totalorder %s21, 0
      %p90 = por %p88, %p89
      %s91 = ssub.s32 %s15, %s22
      %p92 = scmp.eq.s32.totalorder %s91, 0
      %s94 = sadd.s32 %s93, 1
      %s95 = scalar_select %p92, %s93, %s94
      %p98 = pneg %p92
      %p99 = scmp.eq.s32.totalorder %s15, 10
      %p100 = por %p98, %p99
      %p101 = scmp.ne.s32.totalorder %s93, %s96
      %p102 = scmp.eq.s32.totalorder %s15, 0
      %p103 = por %p101, %p102
      %p104 = scmp.ne.s32.totalorder %s93, %s96
      %p105 = scmp.eq.s32.totalorder %s20, 10
      %p106 = por %p104, %p105
      %p107 = scmp.ne.s32.totalorder %s96, %s97
      %p108 = scmp.eq.s32.totalorder %s20, 0
      %p109 = por %p107, %p108
      %p110 = scmp.ne.s32.totalorder %s96, %s97
      %p111 = scmp.eq.s32.totalorder %s21, 10
      %p112 = por %p110, %p111
      %p114 = scmp.ne.s32.totalorder %s97, %s113
      %p115 = scmp.eq.s32.totalorder %s21, 0
      %p116 = por %p114, %p115
      %p117 = scmp.le.s32.totalorder 1, %s15
      %p118 = scmp.lt.s32.totalorder %s15, 12
      %p119 = pnand %p117, %p118
      %p120 = pneg %p119
      // Predicated region
      $region9: #{tpu_custom_call.1} parent=5 // pred_check
        _
      $region10: #{tpu_custom_call.1} parent=5 // pred_check_branch
        %122 = sbr.rel (%p119) target = $region12
      $region11: #{tpu_custom_call.1} parent=5 // pred_region
        %s123 = ssub.s32 %s15, 1
        // Predicated region
        $region13: #{tpu_custom_call.1} parent=11 // pred_check
          %p124 = pneg %p36
        $region14: #{tpu_custom_call.1} parent=11 // pred_check_branch
          %126 = sbr.rel (%p124) target = $region16
        $region15: #{tpu_custom_call.1} parent=11 // pred_region
          _
        $region16: #{tpu_custom_call.1} parent=11 // pred_fallthru
          _
        // Predicated region
        $region17: #{tpu_custom_call.1} parent=11 // pred_check
          %p127 = pneg %p83
        $region18: #{tpu_custom_call.1} parent=11 // pred_check_branch
          %129 = sbr.rel (%p127) target = $region20
        $region19: #{tpu_custom_call.1} parent=11 // pred_region
          _
        $region20: #{tpu_custom_call.1} parent=11 // pred_fallthru
          _
      $region12: #{tpu_custom_call.1} parent=5 // pred_fallthru
        _
      %p130 = scmp.lt.s32.totalorder %s15, 11
      // Predicated region
      $region21: #{tpu_custom_call.1} parent=5 // pred_check
        %p131 = pneg %p130
      $region22: #{tpu_custom_call.1} parent=5 // pred_check_branch
        %133 = sbr.rel (%p131) target = $region24
      $region23: #{tpu_custom_call.1} parent=5 // pred_region
        // Predicated region
        $region25: #{tpu_custom_call.1} parent=23 // pred_check
          %p134 = pneg %p56
        $region26: #{tpu_custom_call.1} parent=23 // pred_check_branch
          %136 = sbr.rel (%p134) target = $region28
        $region27: #{tpu_custom_call.1} parent=23 // pred_region
          %s137 = sand.u32 %s46, 1
          %s138 = scalar_lea.sflag [#allocation3], %s137
          %s139 = sand.u32 %s46, 1
          %s140 = smul.addr %s139, 64
          %s141 = scalar_lea.vmem [#allocation2], %s140
          %s142 = smul.u32 4, %s15
          %s144 = ssub.s32 1024, 1024
          %145 = vsyncadd %s138, %s144
          %s146 = smul.addr %s142, 64
          %s147 = scalar_lea.hbm %s1, %s146
          %s148 = sshll.u32 %s141, 4
          %s149 = int_to_ptr.vmem [resolvable:$true] %s148
          %154 = dma.hbm_to_vmem [thread:$0]  %s147, 1024, %s149, %s138, 2816, 256, 16
        $region28: #{tpu_custom_call.1} parent=23 // pred_fallthru
          _
      $region24: #{tpu_custom_call.1} parent=5 // pred_fallthru
        _
      %p155 = scmp.le.s32.totalorder 1, %s15
      %p156 = scmp.lt.s32.totalorder %s15, 12
      %p157 = pnand %p155, %p156
      %p158 = pneg %p157
      // Predicated region
      $region29: #{tpu_custom_call.1} parent=5 // pred_check
        _
      $region30: #{tpu_custom_call.1} parent=5 // pred_check_branch
        %160 = sbr.rel (%p157) target = $region32
      $region31: #{tpu_custom_call.1} parent=5 // pred_region
        %s161 = ssub.s32 %s15, 1
        %s162 = sand.u32 %s49, 1
        %s163 = scalar_lea.sflag [#allocation3], %s162
        %s164 = sand.u32 %s49, 1
        %s165 = smul.addr %s164, 64
        %s166 = scalar_lea.vmem [#allocation2], %s165
        // Predicated region
        $region33: #{tpu_custom_call.1} parent=31 // pred_check
          %p167 = pneg %p62
        $region34: #{tpu_custom_call.1} parent=31 // pred_check_branch
          %169 = sbr.rel (%p167) target = $region36
        $region35: #{tpu_custom_call.1} parent=31 // pred_region
          %170 = dma.done %s163, 1024
        $region36: #{tpu_custom_call.1} parent=31 // pred_fallthru
          _
        %p171 = pneg %p36
        %p172 = pneg %p33
        %s173 = sand.u32 %s49, 1
        %s174 = scalar_lea.sflag [#allocation3], %s173
        %s175 = sand.u32 %s49, 1
        %s176 = smul.addr %s175, 64
        %s177 = scalar_lea.vmem [#allocation2], %s176
        %p178 = pneg %p62
        %p179 = pneg %p59
        %p180 = pneg %p83
        %p181 = pneg %p80
        %p182 = pneg %p109
        %p183 = pneg %p106
        %s184 = sand.u32 %s96, 1
        %s185 = scalar_lea.sflag [#allocation4], %s184
        %s186 = sand.u32 %s96, 1
        %s187 = smul.addr %s186, 8
        %s188 = scalar_lea.vmem [#allocation5], %s187
        %s189 = smul.u32 4, %s20
        %s190 = smul.u32 4, %s20
        %v192 = vld [vmem:[%s0] sm:$0x3]
        %v193 = vld [vmem:[%s166] sm:$0xff]
        %v194 = vld [vmem:[%s166 + $0x8] sm:$0xff]
        %v195 = vld [vmem:[%s166 + $0x10] sm:$0xff]
        %v196 = vld [vmem:[%s166 + $0x18] sm:$0xff]
        %v197 = vld [vmem:[%s166 + $0x20] sm:$0xff]
        %v198 = vld [vmem:[%s166 + $0x28] sm:$0xff]
        %v199 = vld [vmem:[%s166 + $0x30] sm:$0x33]
        %v200 = vld [vmem:[%s166 + $0x38] sm:$0x33]
        %v201 = vld [vmem:[%s2] sm:$0xf]
        %203 = vset.pattern.permute.xlu0 0
        %204 = vperm.xlu0 %203, %v201
        %v205 = vpop.permute.xlu0 %204
        %v215 = vunpack.c.l.b16 %v193
        %v216 = vunpack.c.h.b16 %v193
        %v217 = vunpack.c.l.b16 %v194
        %v218 = vunpack.c.h.b16 %v194
        %v219 = vunpack.c.l.b16 %v195
        %v220 = vunpack.c.h.b16 %v195
        %v221 = vunpack.c.l.b16 %v196
        %v222 = vunpack.c.h.b16 %v196
        %v223 = vunpack.c.l.b16 %v197
        %v224 = vunpack.c.h.b16 %v197
        %v225 = vunpack.c.l.b16 %v198
        %v226 = vunpack.c.h.b16 %v198
        %v227 = vunpack.c.l.b16 %v199
        %v228 = vunpack.c.h.b16 %v199
        %v229 = vunpack.c.l.b16 %v200
        %v230 = vunpack.c.h.b16 %v200
        %v231 = vpack.c.b16 %v219, %v215
        %v232 = vpack.c.b16 %v220, %v216
        %v233 = vpack.c.b16 %v221, %v217
        %v234 = vpack.c.b16 %v222, %v218
        %v235 = vpack.c.b16 %v227, %v223
        %v236 = vpack.c.b16 %v228, %v224
        %v237 = vpack.c.b16 %v229, %v225
        %v238 = vpack.c.b16 %v230, %v226
        %vm243 = vcmask 220160
        %v245 = vsel %vm243, %v192, 0
        %vm247 = vcmask 1044480
        %vm248 = vcmask 1045504
        %v249 = vsel %vm247, 4294967295, 65535
        %v250 = vsel %vm248, %v249, 0
        %v252 = vand.u32 %v235, %v250
        %v255 = vand.u32 %v236, %v250
        %v258 = vand.u32 %v237, %v250
        %v261 = vand.u32 %v238, %v250
        %263 = vmatprep.subr.bf16.mxu0 0
        %264 = vmatpush1.bf16.msra.mxu0 0
        %265 = vmatprep.subr.bf16.mxu0 0
        %266 = vmatpush1.bf16.msra.mxu0 0
        %267 = vmatprep.subr.bf16.mxu0 0
        %268 = vmatpush1.bf16.msra.mxu0 0
        %269 = vmatprep.subr.bf16.mxu0 0
        %270 = vmatpush1.bf16.msra.mxu0 0
        %271 = vmatprep.subr.bf16.mxu0 0
        %272 = vmatpush1.bf16.msra.mxu0 0
        %273 = vmatprep.subr.bf16.mxu0 0
        %274 = vmatpush1.bf16.msra.mxu0 0
        %275 = vmatprep.subr.bf16.mxu0 %v255
        %276 = vmatpush1.bf16.msra.mxu0 %v252
        %277 = vmatprep.subr.bf16.mxu0 %v232
        %278 = vmatpush1.bf16.msra.mxu0 %v231
        %279 = vmatprep.subr.bf16.mxu0 0
        %280 = vmatpush2.bf16.msra.mxu0 0
        %281 = vmatprep.subr.bf16.mxu0 0
        %282 = vmatpush2.bf16.msra.mxu0 0
        %283 = vmatprep.subr.bf16.mxu0 0
        %284 = vmatpush2.bf16.msra.mxu0 0
        %285 = vmatprep.subr.bf16.mxu0 0
        %286 = vmatpush2.bf16.msra.mxu0 0
        %287 = vmatprep.subr.bf16.mxu0 0
        %288 = vmatpush2.bf16.msra.mxu0 0
        %289 = vmatprep.subr.bf16.mxu0 0
        %290 = vmatpush2.bf16.msra.mxu0 0
        %291 = vmatprep.subr.bf16.mxu0 0
        %292 = vmatpush2.bf16.msra.mxu0 0
        %293 = vmatprep.subr.bf16.mxu0 0
        %294 = vmatpush2.bf16.msra.mxu0 0
        %295 = vmatprep.mubr.bf16.mxu0 0
        %296 = vmatmul.mubr.bf16.gmra.mxu0 %v245
        %v297 = vpop.f32.mrf.mxu0
        %v298 = vadd.f32 %v205, %v297
        %v299 = vpop.f32.mrf.mxu0
        %v300 = vadd.f32 %v205, %v299
        %v301 = vpop.f32.mrf.mxu0
        %v302 = vpop.f32.mrf.mxu0
        %303 = vdwg.mxu0
        %304 = vmatprep.subr.bf16.mxu0 0
        %305 = vmatpush1.bf16.msra.mxu0 0
        %306 = vmatprep.subr.bf16.mxu0 0
        %307 = vmatpush1.bf16.msra.mxu0 0
        %308 = vmatprep.subr.bf16.mxu0 0
        %309 = vmatpush1.bf16.msra.mxu0 0
        %310 = vmatprep.subr.bf16.mxu0 0
        %311 = vmatpush1.bf16.msra.mxu0 0
        %312 = vmatprep.subr.bf16.mxu0 0
        %313 = vmatpush1.bf16.msra.mxu0 0
        %314 = vmatprep.subr.bf16.mxu0 0
        %315 = vmatpush1.bf16.msra.mxu0 0
        %316 = vmatprep.subr.bf16.mxu0 %v261
        %317 = vmatpush1.bf16.msra.mxu0 %v258
        %318 = vmatprep.subr.bf16.mxu0 %v234
        %319 = vmatpush1.bf16.msra.mxu0 %v233
        %320 = vmatprep.subr.bf16.mxu0 0
        %321 = vmatpush2.bf16.msra.mxu0 0
        %322 = vmatprep.subr.bf16.mxu0 0
        %323 = vmatpush2.bf16.msra.mxu0 0
        %324 = vmatprep.subr.bf16.mxu0 0
        %325 = vmatpush2.bf16.msra.mxu0 0
        %326 = vmatprep.subr.bf16.mxu0 0
        %327 = vmatpush2.bf16.msra.mxu0 0
        %328 = vmatprep.subr.bf16.mxu0 0
        %329 = vmatpush2.bf16.msra.mxu0 0
        %330 = vmatprep.subr.bf16.mxu0 0
        %331 = vmatpush2.bf16.msra.mxu0 0
        %332 = vmatprep.subr.bf16.mxu0 0
        %333 = vmatpush2.bf16.msra.mxu0 0
        %334 = vmatprep.subr.bf16.mxu0 0
        %335 = vmatpush2.bf16.msra.mxu0 0
        %336 = vmatprep.mubr.bf16.mxu0 0
        %337 = vmatmul.mubr.bf16.gmra.mxu0 %v245
        %v338 = vpop.f32.mrf.mxu0
        %v339 = vadd.f32 %v205, %v338
        %v340 = vpop.f32.mrf.mxu0
        %v341 = vadd.f32 %v205, %v340
        %v342 = vpop.f32.mrf.mxu0
        %v343 = vpop.f32.mrf.mxu0
        %344 = vdwg.mxu0
        %v345 = vmax.f32 %v298, 0.0
        %v346 = vmax.f32 %v300, 0.0
        %v347 = vmax.f32 %v339, 0.0
        %v348 = vmax.f32 %v341, 0.0
        %v349 = vpack.c.bf16 %v345, %v345
        %v350 = vpack.c.bf16 %v346, %v346
        %v351 = vpack.c.bf16 %v347, %v347
        %v352 = vpack.c.bf16 %v348, %v348
        %v357 = vcombine.low %v349, %v350
        %v358 = vcombine.low %v351, %v352
        %v360 = vunpack.c.l.s4 1983009808
        %v361 = vunpack.c.0.s8 %v360
        %v362 = vlaneseq
        %v363 = vshrl.u32 %v362, 7
        %v364 = vsub.s32 %v361, %v363
        %v365 = vrot.slane %v357, %v364
        %v367 = vunpack.c.l.s4 1983009808
        %v368 = vunpack.c.0.s8 %v367
        %v369 = vlaneseq
        %v370 = vshrl.u32 %v369, 7
        %v371 = vsub.s32 %v368, %v370
        %v372 = vrot.slane %v358, %v371
        %v373 = vcombine.low %v365, %v372
        %375 = vst [vmem:[%s188] sm:$0xff] %v373
        %s376 = sand.u32 %s96, 1
        %s377 = scalar_lea.sflag [#allocation4], %s376
        %s378 = sand.u32 %s96, 1
        %s379 = smul.addr %s378, 8
        %s380 = scalar_lea.vmem [#allocation5], %s379
        // Predicated region
        $region37: #{tpu_custom_call.1} parent=31 // pred_check
          %p381 = pneg %p106
        $region38: #{tpu_custom_call.1} parent=31 // pred_check_branch
          %383 = sbr.rel (%p381) target = $region40
        $region39: #{tpu_custom_call.1} parent=31 // pred_region
          %s384 = smul.u32 4, %s20
          %s386 = ssub.s32 128, 128
          %387 = vsyncadd %s377, %s386
          %s388 = smul.addr %s384, 32
          %s389 = scalar_lea.hbm %s3, %s388
          %s391 = sshll.u32 %s380, 4
          %s392 = int_to_ptr.vmem [resolvable:$true] %s391
          %394 = dma.vmem_to_hbm [thread:$0]  %s392, 128, %s389, %s377
        $region40: #{tpu_custom_call.1} parent=31 // pred_fallthru
          _
      $region32: #{tpu_custom_call.1} parent=5 // pred_fallthru
        _
      %p395 = scmp.le.s32.totalorder 2, %s15
      // Predicated region
      $region41: #{tpu_custom_call.1} parent=5 // pred_check
        %p396 = pneg %p395
      $region42: #{tpu_custom_call.1} parent=5 // pred_check_branch
        %398 = sbr.rel (%p396) target = $region44
      $region43: #{tpu_custom_call.1} parent=5 // pred_region
        %s399 = ssub.s32 %s15, 2
        // Predicated region
        $region45: #{tpu_custom_call.1} parent=43 // pred_check
          %p400 = pneg %p112
        $region46: #{tpu_custom_call.1} parent=43 // pred_check_branch
          %402 = sbr.rel (%p400) target = $region48
        $region47: #{tpu_custom_call.1} parent=43 // pred_region
          %s403 = sand.u32 %s97, 1
          %s404 = scalar_lea.sflag [#allocation4], %s403
          %s405 = sand.u32 %s97, 1
          %s406 = smul.addr %s405, 8
          %s407 = scalar_lea.vmem [#allocation5], %s406
          %408 = dma.done %s404, 128
        $region48: #{tpu_custom_call.1} parent=43 // pred_fallthru
          _
      $region44: #{tpu_custom_call.1} parent=5 // pred_fallthru
        _
    $region6: #{tpu_custom_call.1} parent=1 // loop_footer
      %s19 = sadd.s32 1, %s15
    $region7: #{tpu_custom_call.1} parent=1 // loop_footer_branch
      %14 = sbr.rel target = $region3
    $region8: #{tpu_custom_call.1} parent=1 // loop_exit
      _
    %409 = vsyncpa [#allocation3], 1
    %s410 = scalar_lea.sflag [#allocation3], 1
    %411 = vsyncpa %s410, 1
    %412 = vsyncpa [#allocation4], 1
    %s413 = scalar_lea.sflag [#allocation4], 1
    %414 = vsyncpa %s413, 1

</llo_original>
